<compile_context>
chip_gen: v7x
topology: tpu7x:2x2x1
jax: 0.10.0
libtpu: 0.0.40
codegen_flags: <defaults>
</compile_context>

<pallas_src>
import math
import functools

import jax
import jax.numpy as jnp
from jax.experimental import pallas as pl
from jax.experimental.pallas import tpu as pltpu


# -----------------------------------------------------------------------------
# Pallas kernel.
#
# grid = (B, HW tiles).  For grid point (b, h):
#   W_dyn  = sum_k kernel_attn[b, k] * W[k]          (f32, experts -> (O, K*K*C))
#   W_dyn *= filter_attn[b][:, None]                 (fold output-row scale)
#   W_dyn *= (spatial_attn x channel_attn)[b][None]  (fold contraction-col scale)
#   out[b, :, h-tile] = bf16(W_dyn) @ bf16 patches[b, :, h-tile]   (f32 accumulate)
# -----------------------------------------------------------------------------
def _odconv_kernel(p_ref, w_ref, s_ref, fa_ref, ka_ref, o_ref, *, kernel_num):
    b = pl.program_id(0)

    # Aggregate the expert weights for this sample (f32; Kn is tiny and static).
    w = w_ref[0] * ka_ref[b, 0]
    for kk in range(1, kernel_num):
        w = w + w_ref[kk] * ka_ref[b, kk]

    # Fold filter attention (rows = O) and spatial*channel attention
    # (cols = K*K*C) into the small dynamic weight, in f32, then round once.
    w = w * fa_ref[0, 0][:, None] * s_ref[0, 0][None, :]

    # One lane-dense matmul: (O, K*K*C) @ (K*K*C, TH) -> (O, TH), lanes = HW.
    o_ref[0] = jnp.dot(w.astype(jnp.bfloat16), p_ref[0],
                       preferred_element_type=jnp.float32).astype(o_ref.dtype)


# -----------------------------------------------------------------------------
# Attention branch (tiny 1x1-conv MLPs on globally pooled features) -- glue JAX.
# -----------------------------------------------------------------------------
def _attention(x_nchw, params, cfg):
    temp = cfg["temperature"]
    pooled = jnp.mean(x_nchw, axis=(2, 3))                       # (B, C)
    y = pooled @ params["fc_w"].T                                # (B, A)
    y = y / jnp.sqrt(1.0 + 1e-5)                                 # BN (eval), weight=1 bias=0
    y = jnp.maximum(y, 0.0)                                      # ReLU

    ca = jax.nn.sigmoid((y @ params["ch_w"].T + params["ch_b"]) / temp)          # (B, C)
    fa = jax.nn.sigmoid((y @ params["fi_w"].T + params["fi_b"]) / temp)          # (B, O)
    sa = jax.nn.sigmoid((y @ params["sp_w"].T + params["sp_b"]) / temp)          # (B, K*K)
    ka = jax.nn.softmax((y @ params["ke_w"].T + params["ke_b"]) / temp, axis=1)  # (B, Kn)
    return ca, fa, sa, ka


# -----------------------------------------------------------------------------
# Wrapper: contraction-major im2col (bf16), HW tiling, one pallas_call.
# -----------------------------------------------------------------------------
def odconv2d_forward(x_nchw, params, cfg):
    B, C, H, W = x_nchw.shape
    K = cfg["kernel_size"]
    O = cfg["out_channels"]
    Kn = cfg["kernel_num"]
    stride = cfg["stride"]
    pad = cfg["padding"]
    dil = cfg["dilation"]
    groups = cfg["groups"]
    assert groups == 1  # TODO(synk): grouped dynamic conv not implemented in this kernel path
    Cg = C // groups
    KKC = K * K * Cg

    ca, fa, sa, ka = _attention(x_nchw, params, cfg)

    Ho = (H + 2 * pad - dil * (K - 1) - 1) // stride + 1
    Wo = (W + 2 * pad - dil * (K - 1) - 1) // stride + 1
    HW = Ho * Wo

    # im2col, contraction-major (B, K*K*C, HW), bf16 for the MXU / halved HBM bytes.
    # TODO(synk): replace with an in-kernel halo-tile gather so the input is read
    #             from HBM ~once instead of ~K*K times.
    xpad = jnp.pad(x_nchw, ((0, 0), (0, 0), (pad, pad), (pad, pad)))
    cols = []
    for kh in range(K):
        for kw in range(K):
            hs, ws = kh * dil, kw * dil
            sl = xpad[:, :, hs:hs + (Ho - 1) * stride + 1:stride,
                            ws:ws + (Wo - 1) * stride + 1:stride]      # (B, C, Ho, Wo)
            cols.append(sl.reshape(B, Cg, HW))
    patches = jnp.concatenate(cols, axis=1).astype(jnp.bfloat16)       # (B, KKC, HW)

    # Lane tile over HW: multiple of 128, capped so VMEM stays small on v7x.
    LANE = 128
    hw_base = ((HW + LANE - 1) // LANE) * LANE
    TH = min(hw_base, 512)
    HWp = ((HW + TH - 1) // TH) * TH
    if HWp != HW:
        patches = jnp.pad(patches, ((0, 0), (0, 0), (0, HWp - HW)))
    n_hw = HWp // TH

    # Expert weights as (Kn, O, K*K*C), tap-major to match the patch rows.
    # Kept f32 (DMA'd once, VMEM-resident) so attention folding happens in f32.
    w_r = jnp.transpose(params["weight"], (0, 1, 3, 4, 2)).reshape(Kn, O, KKC)
    w_r = w_r.astype(jnp.float32)

    # Per-sample contraction-column scale: spatial_attn(tap) * channel_attn(chan).
    s = (sa[:, :, None] * ca[:, None, :]).reshape(B, 1, KKC).astype(jnp.float32)
    fattn = fa.reshape(B, 1, O).astype(jnp.float32)
    kattn = ka.astype(jnp.float32)                 # (B, Kn)  -> SMEM scalars

    kernel = functools.partial(_odconv_kernel, kernel_num=Kn)

    flops = 2 * B * HWp * KKC * O + 2 * B * n_hw * Kn * O * KKC
    bytes_accessed = (B * KKC * HWp * 2          # bf16 patches
                      + Kn * O * KKC * 4         # f32 expert weights (once)
                      + B * KKC * 4 + B * O * 4 + B * Kn * 4
                      + B * O * HWp * 4)         # f32 output

    out_flat = pl.pallas_call(
        kernel,
        out_shape=jax.ShapeDtypeStruct((B, O, HWp), jnp.float32),
        grid=(B, n_hw),
        in_specs=[
            pl.BlockSpec((1, KKC, TH), lambda b, h: (b, 0, h)),      # patches (bf16), lanes = HW
            pl.BlockSpec((Kn, O, KKC), lambda b, h: (0, 0, 0)),      # expert weights, resident
            pl.BlockSpec((1, 1, KKC), lambda b, h: (b, 0, 0)),       # sa x ca column scale
            pl.BlockSpec((1, 1, O), lambda b, h: (b, 0, 0)),         # filter attention
            pl.BlockSpec(memory_space=pltpu.MemorySpace.SMEM),       # kernel attention (B, Kn)
        ],
        out_specs=pl.BlockSpec((1, O, TH), lambda b, h: (b, 0, h)),  # lane-dense, NCHW-flat
        compiler_params=pltpu.CompilerParams(
            dimension_semantics=("parallel", "parallel"),
            vmem_limit_bytes=32 * 1024 * 1024),
        cost_estimate=pl.CostEstimate(flops=flops, transcendentals=0,
                                      bytes_accessed=bytes_accessed),
    )(patches, w_r, s, fattn, kattn)

    # (B, O, HWp) is already channel-major: just drop lane padding and reshape.
    out = out_flat[:, :, :HW].reshape(B, O, Ho, Wo)
    return out


# -----------------------------------------------------------------------------
# Pure-JAX reference mirroring the PyTorch forward (grouped conv trick), f32.
# -----------------------------------------------------------------------------
def odconv2d_reference(x_nchw, params, cfg):
    B, C, H, W = x_nchw.shape
    K = cfg["kernel_size"]
    O = cfg["out_channels"]
    Kn = cfg["kernel_num"]
    Cg = C // cfg["groups"]

    ca, fa, sa, ka = _attention(x_nchw, params, cfg)

    xs = (x_nchw * ca[:, :, None, None]).reshape(1, B * C, H, W)
    sattn = sa.reshape(B, 1, 1, 1, K, K)
    kattn = ka.reshape(B, Kn, 1, 1, 1, 1)
    aggw = jnp.sum(sattn * kattn * params["weight"][None], axis=1)
    aggw = aggw.reshape(B * O, Cg, K, K)
    out = jax.lax.conv_general_dilated(
        xs, aggw,
        window_strides=(cfg["stride"], cfg["stride"]),
        padding=[(cfg["padding"], cfg["padding"])] * 2,
        rhs_dilation=(cfg["dilation"], cfg["dilation"]),
        dimension_numbers=("NCHW", "OIHW", "NCHW"),
        feature_group_count=B * cfg["groups"],
    )
    out = out.reshape(B, O, out.shape[-2], out.shape[-1])
    return out * fa[:, :, None, None]


# -----------------------------------------------------------------------------
# Deterministic synthetic parameter init (kaiming-style normal, biases = 0).
# -----------------------------------------------------------------------------
def _kaiming(key, shape):
    receptive = 1
    for s in shape[2:]:
        receptive *= s
    std = math.sqrt(2.0 / (shape[0] * receptive))
    return std * jax.random.normal(key, shape, jnp.float32)


def make_params(key, cfg):
    C, O, K, Kn = cfg["in_channels"], cfg["out_channels"], cfg["kernel_size"], cfg["kernel_num"]
    A = max(int(C * cfg["reduction"]), 16)
    ks = jax.random.split(key, 6)
    return {
        "fc_w": _kaiming(ks[0], (A, C)),
        "ch_w": _kaiming(ks[1], (C, A)), "ch_b": jnp.zeros((C,), jnp.float32),
        "fi_w": _kaiming(ks[2], (O, A)), "fi_b": jnp.zeros((O,), jnp.float32),
        "sp_w": _kaiming(ks[3], (K * K, A)), "sp_b": jnp.zeros((K * K,), jnp.float32),
        "ke_w": _kaiming(ks[4], (Kn, A)), "ke_b": jnp.zeros((Kn,), jnp.float32),
        "weight": _kaiming(ks[5], (Kn, O, C // cfg["groups"], K, K)),
    }


if __name__ == "__main__":
    cfg = dict(in_channels=4, out_channels=8, kernel_size=3, stride=1, padding=1,
               dilation=1, groups=1, reduction=0.0625, kernel_num=4, temperature=1.0)

    key = jax.random.PRNGKey(0)
    kx, kp = jax.random.split(key)
    x = jax.random.normal(kx, (2, cfg["in_channels"], 16, 16), jnp.float32)  # NCHW
    params = make_params(kp, cfg)

    out = jax.block_until_ready(odconv2d_forward(x, params, cfg))
    ref = jax.block_until_ready(odconv2d_reference(x, params, cfg))

    assert out.shape == ref.shape == (2, cfg["out_channels"], 16, 16), out.shape
    # Tolerance sized for bf16 MXU operands (f32 accumulation); reference is pure f32.
    assert jnp.allclose(out, ref, rtol=2e-2, atol=2e-2), float(jnp.max(jnp.abs(out - ref)))

    print("KERNEL_OK")
</pallas_src>

<mosaic_0001>
module attributes {stable_mosaic.version = 11 : i64} {
  func.func @_odconv_kernel(%arg0: i32, %arg1: i32, %arg2: memref<1x36x256xbf16, #tpu.memory_space<vmem>>, %arg3: memref<4x8x36xf32, #tpu.memory_space<vmem>>, %arg4: memref<1x1x36xf32, #tpu.memory_space<vmem>>, %arg5: memref<1x1x8xf32, #tpu.memory_space<vmem>>, %arg6: memref<2x4xf32, #tpu.memory_space<smem>>, %arg7: memref<1x8x256xf32, #tpu.memory_space<vmem>>) attributes {dimension_semantics = [#tpu.dimension_semantics<parallel>, #tpu.dimension_semantics<parallel>], iteration_bounds = array<i64: 2, 1>, scalar_prefetch = 0 : i64, scratch_operands = 0 : i64, tpu.core_type = #tpu.core_type<tc>, window_params = [{transform_indices = @transform_0, window_bounds = array<i64: 1, 36, 256>}, {pipeline_mode = #tpu.pipeline_mode<synchronous>, transform_indices = @transform_1, window_bounds = array<i64: 4, 8, 36>}, {transform_indices = @transform_2, window_bounds = array<i64: 1, 1, 36>}, {transform_indices = @transform_3, window_bounds = array<i64: 1, 1, 8>}, {transform_indices = @transform_4, window_bounds = array<i64: 2, 4>}, {transform_indices = @transform_5, window_bounds = array<i64: 1, 8, 256>}]} {
    %c0 = arith.constant 0 : index
    %c0_0 = arith.constant 0 : index
    %c0_1 = arith.constant 0 : index
    %0 = vector.load %arg3[%c0, %c0_0, %c0_1] : memref<4x8x36xf32, #tpu.memory_space<vmem>>, vector<1x8x36xf32>
    %1 = vector.shape_cast %0 : vector<1x8x36xf32> to vector<8x36xf32>
    %2 = arith.index_cast %arg0 : i32 to index
    %c0_2 = arith.constant 0 : index
    %3 = memref.load %arg6[%2, %c0_2] : memref<2x4xf32, #tpu.memory_space<smem>>
    %4 = vector.broadcast %3 : f32 to vector<8x36xf32>
    %5 = arith.mulf %1, %4 : vector<8x36xf32>
    %c1 = arith.constant 1 : index
    %c0_3 = arith.constant 0 : index
    %c0_4 = arith.constant 0 : index
    %6 = vector.load %arg3[%c1, %c0_3, %c0_4] : memref<4x8x36xf32, #tpu.memory_space<vmem>>, vector<1x8x36xf32>
    %7 = vector.shape_cast %6 : vector<1x8x36xf32> to vector<8x36xf32>
    %8 = arith.index_cast %arg0 : i32 to index
    %c1_5 = arith.constant 1 : index
    %9 = memref.load %arg6[%8, %c1_5] : memref<2x4xf32, #tpu.memory_space<smem>>
    %10 = vector.broadcast %9 : f32 to vector<8x36xf32>
    %11 = arith.mulf %7, %10 : vector<8x36xf32>
    %12 = arith.addf %5, %11 : vector<8x36xf32>
    %c2 = arith.constant 2 : index
    %c0_6 = arith.constant 0 : index
    %c0_7 = arith.constant 0 : index
    %13 = vector.load %arg3[%c2, %c0_6, %c0_7] : memref<4x8x36xf32, #tpu.memory_space<vmem>>, vector<1x8x36xf32>
    %14 = vector.shape_cast %13 : vector<1x8x36xf32> to vector<8x36xf32>
    %15 = arith.index_cast %arg0 : i32 to index
    %c2_8 = arith.constant 2 : index
    %16 = memref.load %arg6[%15, %c2_8] : memref<2x4xf32, #tpu.memory_space<smem>>
    %17 = vector.broadcast %16 : f32 to vector<8x36xf32>
    %18 = arith.mulf %14, %17 : vector<8x36xf32>
    %19 = arith.addf %12, %18 : vector<8x36xf32>
    %c3 = arith.constant 3 : index
    %c0_9 = arith.constant 0 : index
    %c0_10 = arith.constant 0 : index
    %20 = vector.load %arg3[%c3, %c0_9, %c0_10] : memref<4x8x36xf32, #tpu.memory_space<vmem>>, vector<1x8x36xf32>
    %21 = vector.shape_cast %20 : vector<1x8x36xf32> to vector<8x36xf32>
    %22 = arith.index_cast %arg0 : i32 to index
    %c3_11 = arith.constant 3 : index
    %23 = memref.load %arg6[%22, %c3_11] : memref<2x4xf32, #tpu.memory_space<smem>>
    %24 = vector.broadcast %23 : f32 to vector<8x36xf32>
    %25 = arith.mulf %21, %24 : vector<8x36xf32>
    %26 = arith.addf %19, %25 : vector<8x36xf32>
    %c0_12 = arith.constant 0 : index
    %c0_13 = arith.constant 0 : index
    %c0_14 = arith.constant 0 : index
    %27 = vector.load %arg5[%c0_12, %c0_13, %c0_14] : memref<1x1x8xf32, #tpu.memory_space<vmem>>, vector<1x1x8xf32>
    %28 = vector.shape_cast %27 : vector<1x1x8xf32> to vector<8xf32>
    %29 = vector.shape_cast %28 : vector<8xf32> to vector<8x1xf32>
    %30 = vector.broadcast %29 : vector<8x1xf32> to vector<8x36xf32>
    %31 = arith.mulf %26, %30 : vector<8x36xf32>
    %c0_15 = arith.constant 0 : index
    %c0_16 = arith.constant 0 : index
    %c0_17 = arith.constant 0 : index
    %32 = vector.load %arg4[%c0_15, %c0_16, %c0_17] : memref<1x1x36xf32, #tpu.memory_space<vmem>>, vector<1x1x36xf32>
    %33 = vector.shape_cast %32 : vector<1x1x36xf32> to vector<36xf32>
    %34 = vector.shape_cast %33 : vector<36xf32> to vector<1x36xf32>
    %35 = vector.broadcast %34 : vector<1x36xf32> to vector<8x36xf32>
    %36 = arith.mulf %31, %35 : vector<8x36xf32>
    %37 = arith.truncf %36 : vector<8x36xf32> to vector<8x36xbf16>
    %c0_18 = arith.constant 0 : index
    %c0_19 = arith.constant 0 : index
    %c0_20 = arith.constant 0 : index
    %38 = vector.load %arg2[%c0_18, %c0_19, %c0_20] : memref<1x36x256xbf16, #tpu.memory_space<vmem>>, vector<1x36x256xbf16>
    %39 = vector.shape_cast %38 : vector<1x36x256xbf16> to vector<36x256xbf16>
    %cst = arith.constant dense<0.000000e+00> : vector<8x256xf32>
    %40 = tpu.matmul %37, %39, %cst {dimension_numbers = #tpu.dot_dimension_numbers<[1], [0], [0], [1], [0, 0, 1, 1], [], []>} : vector<8x36xbf16>, vector<36x256xbf16>, vector<8x256xf32> -> vector<8x256xf32>
    %c0_21 = arith.constant 0 : index
    %c0_22 = arith.constant 0 : index
    %c0_23 = arith.constant 0 : index
    %41 = vector.load %arg7[%c0_21, %c0_22, %c0_23] : memref<1x8x256xf32, #tpu.memory_space<vmem>>, vector<1x8x256xf32>
    %42 = vector.shape_cast %41 : vector<1x8x256xf32> to vector<8x256xf32>
    %43 = vector.shape_cast %40 : vector<8x256xf32> to vector<1x8x256xf32>
    tpu.vector_store %arg7[%c0_21, %c0_22, %c0_23], %43 {strides = array<i32>} : memref<1x8x256xf32, #tpu.memory_space<vmem>>, vector<1x8x256xf32>,
    return
  }
  func.func @transform_0(%arg0: i32, %arg1: i32) -> (i32, i32, i32) {
    %c0_i32 = arith.constant 0 : i32
    %c0_i32_0 = arith.constant 0 : i32
    return %arg0, %c0_i32, %arg1 : i32, i32, i32
  }
  func.func @transform_1(%arg0: i32, %arg1: i32) -> (i32, i32, i32) {
    %c0_i32 = arith.constant 0 : i32
    %c0_i32_0 = arith.constant 0 : i32
    %c0_i32_1 = arith.constant 0 : i32
    %c0_i32_2 = arith.constant 0 : i32
    return %c0_i32, %c0_i32_0, %c0_i32_1 : i32, i32, i32
  }
  func.func @transform_2(%arg0: i32, %arg1: i32) -> (i32, i32, i32) {
    %c0_i32 = arith.constant 0 : i32
    %c0_i32_0 = arith.constant 0 : i32
    %c0_i32_1 = arith.constant 0 : i32
    return %arg0, %c0_i32, %c0_i32_0 : i32, i32, i32
  }
  func.func @transform_3(%arg0: i32, %arg1: i32) -> (i32, i32, i32) {
    %c0_i32 = arith.constant 0 : i32
    %c0_i32_0 = arith.constant 0 : i32
    %c0_i32_1 = arith.constant 0 : i32
    return %arg0, %c0_i32, %c0_i32_0 : i32, i32, i32
  }
  func.func @transform_4(%arg0: i32, %arg1: i32) -> (i32, i32) {
    %c0_i32 = arith.constant 0 : i32
    %c0_i32_0 = arith.constant 0 : i32
    %c0_i32_1 = arith.constant 0 : i32
    return %c0_i32, %c0_i32_0 : i32, i32
  }
  func.func @transform_5(%arg0: i32, %arg1: i32) -> (i32, i32, i32) {
    %c0_i32 = arith.constant 0 : i32
    %c0_i32_0 = arith.constant 0 : i32
    return %arg0, %c0_i32, %arg1 : i32, i32, i32
  }
}

</mosaic_0001>

<llo_original>
// kernel: tpu_custom_call.1
$region0: #{tpu_custom_call.1}
  #allocation0 [shape = 'u32[]', space=smem, size = 0x4, offset = 0x4, fixed_abs, tag = 'smem constant byte address 0x4 - core index']
  #allocation1 [shape = 'u32[144,128]{1,0:T(1,128)}', space=vmem, size = 0x12000, scoped, tag = 'internal scratch']
  %s0 = inlined_call_operand.vmem [shape: bf16[2,36,256], index: 0, kind: input, shape index: {}]
  %s1 = inlined_call_operand.vmem [shape: f32[4,8,36], index: 1, kind: input, shape index: {}]
  %s2 = inlined_call_operand.vmem [shape: f32[2,1,36], index: 2, kind: input, shape index: {}]
  %s3 = inlined_call_operand.vmem [shape: f32[2,1,8], index: 3, kind: input, shape index: {}]
  %s4 = inlined_call_operand.vmem [shape: f32[2,4], index: 4, kind: input, shape index: {}]
  %s5 = inlined_call_operand.hbm [shape: f32[2,8,256], index: 5, kind: output, shape index: {}]
  %s6 = sld [smem:[#allocation0]]
  $region57: #{tpu_custom_call.1} parent=0
    _
  %s8 = ssub.s32 1, %s6
  %s9 = scalar_select 0, %s8, %s6
  $region1: #{tpu_custom_call.1} parent=0
    #allocation2 [shape = 'u8[1024]{0}', space=smem, size = 0x400, scoped, tag = 'input window, operand 4, single buffered']
    #allocation3 [shape = 's32[2]{0}', space=sflag, size = 0x8, scoped, tag = 'scoped memory for tpu_custom_call.1']
    #allocation4 [shape = 's32[2]{0}', space=sflag, size = 0x8, scoped, tag = 'scoped memory for tpu_custom_call.1']
    #allocation5 [shape = 'u8[16384]{0}', space=vmem, size = 0x4000, scoped, tag = 'output window, operand 0']
    %10 = vsyncpa [#allocation4], 0
    %11 = vsyncpa [#allocation3], 0
    %s12 = scalar_lea.sflag [#allocation3], 1
    %13 = vsyncpa %s12, 0
    loop: start=0, step=1, limit=4
    $region2: #{tpu_custom_call.1} parent=1 // loop_pre_header
      _
    $region3: #{tpu_custom_call.1} parent=1 // loop_header
      %s15 = sphi 0, %s19
      %p16 = scmp.ge.s32.totalorder %s15, 4
      %s22 = sphi 0, %s34
      %s23 = sphi 0, %s30
      %s24 = sphi 0, %s22
      %s25 = sphi 0, %s23
      %s26 = sphi 0, %s24
      %s27 = sphi 0, %s25
      %s39 = sphi 0, %s41
      %s42 = sphi 0, %s39
      %s43 = sphi 0, %s42
      %s59 = sphi 0, %s43
      %s63 = sphi 0, %s63
      %s65 = sphi 0, %s63
      %s66 = sphi 0, %s65
      %s80 = sphi 0, %s66
      %s86 = sphi 0, %s88
      %s89 = sphi 0, %s86
      %s90 = sphi 0, %s89
      %s106 = sphi 0, %s90
      %s112 = sphi 0, %s114
      %s115 = sphi 0, %s112
      %s116 = sphi 0, %s115
      %s132 = sphi 0, %s116
      %s136 = sphi 0, %s136
      %s138 = sphi 0, %s136
      %s139 = sphi 0, %s138
      %s153 = sphi 0, %s139
      %s161 = sphi 0, %s163
      %s164 = sphi 0, %s161
      %s165 = sphi 0, %s164
      %s181 = sphi 0, %s165
    $region4: #{tpu_custom_call.1} parent=1 // loop_header_branch
      %18 = sbr.rel (%p16) target = $region8
    $region5: #{tpu_custom_call.1} parent=1 // loop_body
      %s20 = ssub.s32 %s15, 1
      %s21 = ssub.s32 %s15, 2
      %s28 = sadd.s32 1, %s23
      %p29 = scmp.ge.s32.totalorder %s28, 1
      %s30 = scalar_select %p29, 0, %s28
      %s31 = sadd.s32 1, %s22
      %s32 = scalar_select %p29, %s31, %s22
      %p33 = scmp.ge.s32.totalorder %s32, 2
      %s34 = scalar_select %p33, 0, %s32
      %s35 = ssub.s32 %s22, %s34
      %s36 = ssub.s32 %s23, %s30
      %s37 = sor.u32 %s35, %s36
      %p38 = scmp.eq.s32.totalorder %s37, 0
      %s40 = sadd.s32 %s39, 1
      %s41 = scalar_select %p38, %s39, %s40
      %p44 = pneg %p38
      %p45 = scmp.eq.s32.totalorder %s15, 1
      %p46 = por %p44, %p45
      %p47 = scmp.ne.s32.totalorder %s39, %s42
      %p48 = scmp.eq.s32.totalorder %s15, 0
      %p49 = por %p47, %p48
      %p50 = scmp.ne.s32.totalorder %s39, %s42
      %p51 = scmp.eq.s32.totalorder %s20, 1
      %p52 = por %p50, %p51
      %p53 = scmp.ne.s32.totalorder %s42, %s43
      %p54 = scmp.eq.s32.totalorder %s20, 0
      %p55 = por %p53, %p54
      %p56 = scmp.ne.s32.totalorder %s42, %s43
      %p57 = scmp.eq.s32.totalorder %s21, 1
      %p58 = por %p56, %p57
      %p60 = scmp.ne.s32.totalorder %s43, %s59
      %p61 = scmp.eq.s32.totalorder %s21, 0
      %p62 = por %p60, %p61
      %s64 = sadd.s32 %s63, 1
      %p67 = scmp.eq.s32.totalorder %s15, 1
      %p68 = scmp.ne.s32.totalorder %s63, %s65
      %p69 = scmp.eq.s32.totalorder %s15, 0
      %p70 = por %p68, %p69
      %p71 = scmp.ne.s32.totalorder %s63, %s65
      %p72 = scmp.eq.s32.totalorder %s20, 1
      %p73 = por %p71, %p72
      %p74 = scmp.ne.s32.totalorder %s65, %s66
      %p75 = scmp.eq.s32.totalorder %s20, 0
      %p76 = por %p74, %p75
      %p77 = scmp.ne.s32.totalorder %s65, %s66
      %p78 = scmp.eq.s32.totalorder %s21, 1
      %p79 = por %p77, %p78
      %p81 = scmp.ne.s32.totalorder %s66, %s80
      %p82 = scmp.eq.s32.totalorder %s21, 0
      %p83 = por %p81, %p82
      %s84 = ssub.s32 %s22, %s34
      %p85 = scmp.eq.s32.totalorder %s84, 0
      %s87 = sadd.s32 %s86, 1
      %s88 = scalar_select %p85, %s86, %s87
      %p91 = pneg %p85
      %p92 = scmp.eq.s32.totalorder %s15, 1
      %p93 = por %p91, %p92
      %p94 = scmp.ne.s32.totalorder %s86, %s89
      %p95 = scmp.eq.s32.totalorder %s15, 0
      %p96 = por %p94, %p95
      %p97 = scmp.ne.s32.totalorder %s86, %s89
      %p98 = scmp.eq.s32.totalorder %s20, 1
      %p99 = por %p97, %p98
      %p100 = scmp.ne.s32.totalorder %s89, %s90
      %p101 = scmp.eq.s32.totalorder %s20, 0
      %p102 = por %p100, %p101
      %p103 = scmp.ne.s32.totalorder %s89, %s90
      %p104 = scmp.eq.s32.totalorder %s21, 1
      %p105 = por %p103, %p104
      %p107 = scmp.ne.s32.totalorder %s90, %s106
      %p108 = scmp.eq.s32.totalorder %s21, 0
      %p109 = por %p107, %p108
      %s110 = ssub.s32 %s22, %s34
      %p111 = scmp.eq.s32.totalorder %s110, 0
      %s113 = sadd.s32 %s112, 1
      %s114 = scalar_select %p111, %s112, %s113
      %p117 = pneg %p111
      %p118 = scmp.eq.s32.totalorder %s15, 1
      %p119 = por %p117, %p118
      %p120 = scmp.ne.s32.totalorder %s112, %s115
      %p121 = scmp.eq.s32.totalorder %s15, 0
      %p122 = por %p120, %p121
      %p123 = scmp.ne.s32.totalorder %s112, %s115
      %p124 = scmp.eq.s32.totalorder %s20, 1
      %p125 = por %p123, %p124
      %p126 = scmp.ne.s32.totalorder %s115, %s116
      %p127 = scmp.eq.s32.totalorder %s20, 0
      %p128 = por %p126, %p127
      %p129 = scmp.ne.s32.totalorder %s115, %s116
      %p130 = scmp.eq.s32.totalorder %s21, 1
      %p131 = por %p129, %p130
      %p133 = scmp.ne.s32.totalorder %s116, %s132
      %p134 = scmp.eq.s32.totalorder %s21, 0
      %p135 = por %p133, %p134
      %s137 = sadd.s32 %s136, 1
      %p140 = scmp.eq.s32.totalorder %s15, 1
      %p141 = scmp.ne.s32.totalorder %s136, %s138
      %p142 = scmp.eq.s32.totalorder %s15, 0
      %p143 = por %p141, %p142
      %p144 = scmp.ne.s32.totalorder %s136, %s138
      %p145 = scmp.eq.s32.totalorder %s20, 1
      %p146 = por %p144, %p145
      %p147 = scmp.ne.s32.totalorder %s138, %s139
      %p148 = scmp.eq.s32.totalorder %s20, 0
      %p149 = por %p147, %p148
      %p150 = scmp.ne.s32.totalorder %s138, %s139
      %p151 = scmp.eq.s32.totalorder %s21, 1
      %p152 = por %p150, %p151
      %p154 = scmp.ne.s32.totalorder %s139, %s153
      %p155 = scmp.eq.s32.totalorder %s21, 0
      %p156 = por %p154, %p155
      %s157 = ssub.s32 %s22, %s34
      %s158 = ssub.s32 %s23, %s30
      %s159 = sor.u32 %s157, %s158
      %p160 = scmp.eq.s32.totalorder %s159, 0
      %s162 = sadd.s32 %s161, 1
      %s163 = scalar_select %p160, %s161, %s162
      %p166 = pneg %p160
      %p167 = scmp.eq.s32.totalorder %s15, 1
      %p168 = por %p166, %p167
      %p169 = scmp.ne.s32.totalorder %s161, %s164
      %p170 = scmp.eq.s32.totalorder %s15, 0
      %p171 = por %p169, %p170
      %p172 = scmp.ne.s32.totalorder %s161, %s164
      %p173 = scmp.eq.s32.totalorder %s20, 1
      %p174 = por %p172, %p173
      %p175 = scmp.ne.s32.totalorder %s164, %s165
      %p176 = scmp.eq.s32.totalorder %s20, 0
      %p177 = por %p175, %p176
      %p178 = scmp.ne.s32.totalorder %s164, %s165
      %p179 = scmp.eq.s32.totalorder %s21, 1
      %p180 = por %p178, %p179
      %p182 = scmp.ne.s32.totalorder %s165, %s181
      %p183 = scmp.eq.s32.totalorder %s21, 0
      %p184 = por %p182, %p183
      %p185 = scmp.le.s32.totalorder 1, %s15
      %p186 = scmp.lt.s32.totalorder %s15, 3
      %p187 = pnand %p185, %p186
      %p188 = pneg %p187
      // Predicated region
      $region9: #{tpu_custom_call.1} parent=5 // pred_check
        _
      $region10: #{tpu_custom_call.1} parent=5 // pred_check_branch
        %190 = sbr.rel (%p187) target = $region12
      $region11: #{tpu_custom_call.1} parent=5 // pred_region
        %s191 = ssub.s32 %s15, 1
        // Predicated region
        $region13: #{tpu_custom_call.1} parent=11 // pred_check
          %p192 = pneg %p76
        $region14: #{tpu_custom_call.1} parent=11 // pred_check_branch
          %194 = sbr.rel (%p192) target = $region16
        $region15: #{tpu_custom_call.1} parent=11 // pred_region
          _
        $region16: #{tpu_custom_call.1} parent=11 // pred_fallthru
          _
        // Predicated region
        $region17: #{tpu_custom_call.1} parent=11 // pred_check
          %p195 = pneg %p149
        $region18: #{tpu_custom_call.1} parent=11 // pred_check_branch
          %197 = sbr.rel (%p195) target = $region20
        $region19: #{tpu_custom_call.1} parent=11 // pred_region
          %s199 = ssub.s32 32, 32
          %200 = vsyncadd [#allocation4], %s199
          %s202 = sshll.u32 %s4, 4
          %s203 = int_to_ptr.vmem [resolvable:$true] %s202
          %205 = dma.vmem_to_smem %s203, 32, [#allocation2], [#allocation4]
        $region20: #{tpu_custom_call.1} parent=11 // pred_fallthru
          _
      $region12: #{tpu_custom_call.1} parent=5 // pred_fallthru
        _
      %p206 = scmp.lt.s32.totalorder %s15, 2
      // Predicated region
      $region21: #{tpu_custom_call.1} parent=5 // pred_check
        %p207 = pneg %p206
      $region22: #{tpu_custom_call.1} parent=5 // pred_check_branch
        %209 = sbr.rel (%p207) target = $region24
      $region23: #{tpu_custom_call.1} parent=5 // pred_region
        // Predicated region
        $region25: #{tpu_custom_call.1} parent=23 // pred_check
          %p210 = pneg %p49
        $region26: #{tpu_custom_call.1} parent=23 // pred_check_branch
          %212 = sbr.rel (%p210) target = $region28
        $region27: #{tpu_custom_call.1} parent=23 // pred_region
          %s213 = smul.u32 2, %s23
          %p214 = scmp.lt.s32.totalorder %s22, 1
          %s215 = scalar_select %p214, %s22, 1
          %p216 = scmp.lt.s32.totalorder %s213, 1
          %s217 = scalar_select %p216, %s213, 1
          %s218 = smul.addr %s215, 10
          %s219 = sadd.s32 %s217, %s218
          %s220 = smul.addr %s219, 4
          %s221 = scalar_lea.vmem %s0, %s220
          %s222 = smul.u32 2, %s23
        $region28: #{tpu_custom_call.1} parent=23 // pred_fallthru
          _
        // Predicated region
        $region29: #{tpu_custom_call.1} parent=23 // pred_check
          %p223 = pneg %p96
        $region30: #{tpu_custom_call.1} parent=23 // pred_check_branch
          %225 = sbr.rel (%p223) target = $region32
        $region31: #{tpu_custom_call.1} parent=23 // pred_region
          %p226 = scmp.lt.s32.totalorder %s22, 1
          %s227 = scalar_select %p226, %s22, 1
          %s228 = scalar_lea.vmem %s2, %s227
        $region32: #{tpu_custom_call.1} parent=23 // pred_fallthru
          _
        // Predicated region
        $region33: #{tpu_custom_call.1} parent=23 // pred_check
          %p229 = pneg %p122
        $region34: #{tpu_custom_call.1} parent=23 // pred_check_branch
          %231 = sbr.rel (%p229) target = $region36
        $region35: #{tpu_custom_call.1} parent=23 // pred_region
          %p232 = scmp.lt.s32.totalorder %s22, 1
          %s233 = scalar_select %p232, %s22, 1
          %s234 = scalar_lea.vmem %s3, %s233
        $region36: #{tpu_custom_call.1} parent=23 // pred_fallthru
          _
      $region24: #{tpu_custom_call.1} parent=5 // pred_fallthru
        _
      %p235 = scmp.le.s32.totalorder 1, %s15
      %p236 = scmp.lt.s32.totalorder %s15, 3
      %p237 = pnand %p235, %p236
      %p238 = pneg %p237
      // Predicated region
      $region37: #{tpu_custom_call.1} parent=5 // pred_check
        _
      $region38: #{tpu_custom_call.1} parent=5 // pred_check_branch
        %240 = sbr.rel (%p237) target = $region40
      $region39: #{tpu_custom_call.1} parent=5 // pred_region
        %s241 = ssub.s32 %s15, 1
        // Predicated region
        $region41: #{tpu_custom_call.1} parent=39 // pred_check
          %p242 = pneg %p149
        $region42: #{tpu_custom_call.1} parent=39 // pred_check_branch
          %244 = sbr.rel (%p242) target = $region44
        $region43: #{tpu_custom_call.1} parent=39 // pred_region
          %245 = dma.done [#allocation4], 32
        $region44: #{tpu_custom_call.1} parent=39 // pred_fallthru
          _
        %246 = sfence
        %s247 = smul.u32 2, %s25
        %p248 = scmp.lt.s32.totalorder %s24, 1
        %s249 = scalar_select %p248, %s24, 1
        %p250 = scmp.lt.s32.totalorder %s247, 1
        %s251 = scalar_select %p250, %s247, 1
        %s252 = smul.addr %s249, 10
        %s253 = sadd.s32 %s251, %s252
        %s254 = smul.addr %s253, 4
        %s255 = scalar_lea.vmem %s0, %s254
        %p256 = pneg %p55
        %p257 = pneg %p52
        %p258 = pneg %p76
        %p259 = pneg %p73
        %p260 = scmp.lt.s32.totalorder %s24, 1
        %s261 = scalar_select %p260, %s24, 1
        %s262 = scalar_lea.vmem %s2, %s261
        %p263 = pneg %p102
        %p264 = pneg %p99
        %p265 = scmp.lt.s32.totalorder %s24, 1
        %s266 = scalar_select %p265, %s24, 1
        %s267 = scalar_lea.vmem %s3, %s266
        %p268 = pneg %p128
        %p269 = pneg %p125
        %p270 = pneg %p149
        %p271 = pneg %p146
        %p272 = pneg %p177
        %p273 = pneg %p174
        %s274 = sand.u32 %s164, 1
        %s275 = scalar_lea.sflag [#allocation3], %s274
        %s276 = sand.u32 %s164, 1
        %s277 = smul.addr %s276, 16
        %s278 = scalar_lea.vmem [#allocation5], %s277
        %s279 = smul.u32 2, %s25
        %p280 = scmp.lt.s32.totalorder %s24, 1
        %s281 = scalar_select %p280, %s24, 1
        %p282 = scmp.lt.s32.totalorder %s279, 1
        %s283 = scalar_select %p282, %s279, 1
        %s284 = smul.addr %s281, 10
        %s285 = sadd.s32 %s283, %s284
        %s286 = smul.addr %s285, 4
        %s287 = scalar_lea.vmem %s0, %s286
        %s288 = smul.u32 2, %s25
        %p289 = scmp.lt.s32.totalorder %s24, 1
        %s290 = scalar_select %p289, %s24, 1
        %s291 = scalar_lea.vmem %s2, %s290
        %p292 = scmp.lt.s32.totalorder %s24, 1
        %s293 = scalar_select %p292, %s24, 1
        %s294 = scalar_lea.vmem %s3, %s293
        %s295 = smul.u32 2, %s25
        %v297 = vld [vmem:[%s1] sm:$0xff]
        %s298 = smul.u32 %s24, 128
        %s299 = sld [smem:[#allocation2 + %s298]]
        %v300 = vstv %s299
        %v301 = vmul.f32 %v297, %v300
        %s302 = scalar_lea.vmem %s1, 8
        %v303 = vld [vmem:[%s302] sm:$0xff]
        %s304 = sadd.s32 %s298, 1
        %s305 = sld [smem:[#allocation2 + %s304]]
        %v306 = vstv %s305
        %v307 = vmul.f32 %v303, %v306
        %v308 = vadd.f32 %v301, %v307
        %s309 = scalar_lea.vmem %s1, 16
        %v310 = vld [vmem:[%s309] sm:$0xff]
        %s311 = sadd.s32 %s298, 2
        %s312 = sld [smem:[#allocation2 + %s311]]
        %v313 = vstv %s312
        %v314 = vmul.f32 %v310, %v313
        %v315 = vadd.f32 %v308, %v314
        %s316 = scalar_lea.vmem %s1, 24
        %v317 = vld [vmem:[%s316] sm:$0xff]
        %s318 = sadd.s32 %s298, 3
        %s319 = sld [smem:[#allocation2 + %s318]]
        %v320 = vstv %s319
        %v321 = vmul.f32 %v317, %v320
        %v322 = vadd.f32 %v315, %v321
        %v323 = vld [vmem:[%s294] sm:$0x1]
        %v324 = vlaneseq
        %v325 = vshrl.u32 %v324, 7
        %v326 = vsub.s32 0, %v325
        %v327 = vrot.slane %v323, %v326
        %329 = vbcast.lane.b32.xlu0 %v327, 256
        %v330 = vpop.permute.xlu0 %329
        %v331 = vmul.f32 %v322, %v330
        %v332 = vld [vmem:[%s291] sm:$0x1]
        %v334 = vlaneseq
        %v335 = vshrl.u32 %v334, 7
        %v336 = vsub.s32 0, %v335
        %v337 = vrot.slane %v332, %v336
        %v339 = vmul.f32 %v331, %v337
        %v340 = vpack.c.bf16 %v339, %v339
        %v341 = vld [vmem:[%s287] sm:$0xff]
        %v342 = vld [vmem:[%s287 + $0x8] sm:$0xff]
        %v343 = vld [vmem:[%s287 + $0x10] sm:$0xff]
        %v344 = vld [vmem:[%s287 + $0x18] sm:$0xff]
        %v345 = vld [vmem:[%s287 + $0x20] sm:$0x33]
        %v351 = vunpack.c.l.b16 %v341
        %v352 = vunpack.c.h.b16 %v341
        %v353 = vunpack.c.l.b16 %v342
        %v354 = vunpack.c.h.b16 %v342
        %v355 = vunpack.c.l.b16 %v343
        %v356 = vunpack.c.h.b16 %v343
        %v357 = vunpack.c.l.b16 %v344
        %v358 = vunpack.c.h.b16 %v344
        %v359 = vunpack.c.l.b16 %v345
        %v360 = vunpack.c.h.b16 %v345
        %v361 = vpack.c.b16 %v353, %v351
        %v362 = vpack.c.b16 %v354, %v352
        %v363 = vpack.c.b16 %v357, %v355
        %v364 = vpack.c.b16 %v358, %v356
        %v365 = vpack.c.b16 %v359, %v359
        %v366 = vpack.c.b16 %v360, %v360
        %vm371 = vcmask 293888
        %v373 = vsel %vm371, %v340, 0
        %vm375 = vcmask 1041408
        %v377 = vsel %vm375, %v365, 0
        %v380 = vsel %vm375, %v366, 0
        %382 = vmatprep.subr.bf16.mxu0 %v362
        %383 = vmatpush1.bf16.msra.mxu0 %v361
        %384 = vmatprep.subr.bf16.mxu0 %v364
        %385 = vmatpush1.bf16.msra.mxu0 %v363
        %386 = vmatprep.subr.bf16.mxu0 %v380
        %387 = vmatpush1.bf16.msra.mxu0 %v377
        %388 = vmatprep.subr.bf16.mxu0 0
        %389 = vmatpush1.bf16.msra.mxu0 0
        %390 = vmatprep.subr.bf16.mxu0 0
        %391 = vmatpush1.bf16.msra.mxu0 0
        %392 = vmatprep.subr.bf16.mxu0 0
        %393 = vmatpush1.bf16.msra.mxu0 0
        %394 = vmatprep.subr.bf16.mxu0 0
        %395 = vmatpush1.bf16.msra.mxu0 0
        %396 = vmatprep.subr.bf16.mxu0 0
        %397 = vmatpush1.bf16.msra.mxu0 0
        %398 = vmatprep.subr.bf16.mxu0 0
        %399 = vmatpush1.bf16.msra.mxu0 0
        %400 = vmatprep.subr.bf16.mxu0 0
        %401 = vmatpush1.bf16.msra.mxu0 0
        %402 = vmatprep.subr.bf16.mxu0 0
        %403 = vmatpush1.bf16.msra.mxu0 0
        %404 = vmatprep.subr.bf16.mxu0 0
        %405 = vmatpush1.bf16.msra.mxu0 0
        %406 = vmatprep.subr.bf16.mxu0 0
        %407 = vmatpush1.bf16.msra.mxu0 0
        %408 = vmatprep.subr.bf16.mxu0 0
        %409 = vmatpush1.bf16.msra.mxu0 0
        %410 = vmatprep.subr.bf16.mxu0 0
        %411 = vmatpush1.bf16.msra.mxu0 0
        %412 = vmatprep.subr.bf16.mxu0 0
        %413 = vmatpush1.bf16.msra.mxu0 0
        %414 = vmatprep.mubr.bf16.mxu0 0
        %415 = vmatmul.mubr.bf16.gmra.mrb[0].mxu0 %v373
        %v416 = vpop.f32.mrb[0].mxu0
        %v417 = vadd.f32 0.0, %v416
        %v418 = vpop.f32.mrb[0].mxu0
        %v419 = vadd.f32 0.0, %v418
        %v420 = vpop.f32.mrb[0].mxu0
        %v421 = vpop.f32.mrb[0].mxu0
        %422 = vdwg.mxu0
        %423 = vst [vmem:[%s278] sm:$0xff] %v417
        %424 = vst [vmem:[%s278 + $0x8] sm:$0xff] %v419
        %s425 = sand.u32 %s164, 1
        %s426 = scalar_lea.sflag [#allocation3], %s425
        %s427 = sand.u32 %s164, 1
        %s428 = smul.addr %s427, 16
        %s429 = scalar_lea.vmem [#allocation5], %s428
        // Predicated region
        $region45: #{tpu_custom_call.1} parent=39 // pred_check
          %p430 = pneg %p174
        $region46: #{tpu_custom_call.1} parent=39 // pred_check_branch
          %432 = sbr.rel (%p430) target = $region48
        $region47: #{tpu_custom_call.1} parent=39 // pred_region
          %s433 = smul.u32 2, %s25
          %s435 = ssub.s32 256, 256
          %436 = vsyncadd %s426, %s435
          %s437 = smul.addr %s24, 2
          %s438 = sadd.s32 %s433, %s437
          %s439 = smul.addr %s438, 128
          %s440 = scalar_lea.hbm %s5, %s439
          %s442 = sshll.u32 %s429, 4
          %s443 = int_to_ptr.vmem [resolvable:$true] %s442
          %445 = dma.vmem_to_hbm [thread:$0]  %s443, 256, %s440, %s426
        $region48: #{tpu_custom_call.1} parent=39 // pred_fallthru
          _
      $region40: #{tpu_custom_call.1} parent=5 // pred_fallthru
        _
      %p446 = scmp.le.s32.totalorder 2, %s15
      // Predicated region
      $region49: #{tpu_custom_call.1} parent=5 // pred_check
        %p447 = pneg %p446
      $region50: #{tpu_custom_call.1} parent=5 // pred_check_branch
        %449 = sbr.rel (%p447) target = $region52
      $region51: #{tpu_custom_call.1} parent=5 // pred_region
        %s450 = ssub.s32 %s15, 2
        // Predicated region
        $region53: #{tpu_custom_call.1} parent=51 // pred_check
          %p451 = pneg %p180
        $region54: #{tpu_custom_call.1} parent=51 // pred_check_branch
          %453 = sbr.rel (%p451) target = $region56
        $region55: #{tpu_custom_call.1} parent=51 // pred_region
          %s454 = sand.u32 %s165, 1
          %s455 = scalar_lea.sflag [#allocation3], %s454
          %s456 = sand.u32 %s165, 1
          %s457 = smul.addr %s456, 16
          %s458 = scalar_lea.vmem [#allocation5], %s457
          %459 = dma.done %s455, 256
        $region56: #{tpu_custom_call.1} parent=51 // pred_fallthru
          _
      $region52: #{tpu_custom_call.1} parent=5 // pred_fallthru
        _
    $region6: #{tpu_custom_call.1} parent=1 // loop_footer
      %s19 = sadd.s32 1, %s15
    $region7: #{tpu_custom_call.1} parent=1 // loop_footer_branch
      %14 = sbr.rel target = $region3
    $region8: #{tpu_custom_call.1} parent=1 // loop_exit
      _
    %460 = vsyncpa [#allocation3], 1
    %s461 = scalar_lea.sflag [#allocation3], 1
    %462 = vsyncpa %s461, 1
    %463 = vsyncpa [#allocation4], 1
    %s464 = scalar_lea.sflag [#allocation4], 1
    %465 = vsyncpa %s464, 1

</llo_original>
